<compile_context>
chip_gen: v7x
topology: tpu7x:2x2x1
jax: 0.10.0
libtpu: 0.0.40
codegen_flags: <defaults>
</compile_context>

<pallas_src>
import jax
import jax.numpy as jnp
from jax.experimental import pallas as pl
from jax.experimental.pallas import tpu as pltpu

BN_EPS = 1e-5
LANE = 128      # lane width: pad feature dims to multiples of this
SUBLANE = 8     # sublane width: pad batch dim to multiples of this


def _round_up(x, m):
    return (x + m - 1) // m * m


def _pad2d(a, rows, cols):
    r, c = a.shape
    if r == rows and c == cols:
        return a
    return jnp.pad(a, ((0, rows - r), (0, cols - c)))


# ---------------------------------------------------------------------------
# Fused Pallas kernel (whole network in one call)
# ---------------------------------------------------------------------------
def _make_fused_kernel(num_weights, n_valid, n_pad):
    """Kernel: x_ref, w0_ref, ..., w_{L-1}_ref, o_ref -> fused forward.

    All operands are full (padded) arrays resident in VMEM. Rows >= n_valid are
    zero padding; because padded rows of the input are zero, per-column sums over
    all n_pad rows equal sums over the n_valid real rows (no mask multiply needed
    for the statistics). Padded rows are re-zeroed after each ReLU only when the
    result feeds another BatchNorm layer.
    """
    num_hidden = num_weights - 1

    def kernel(*refs):
        x_ref = refs[0]
        w_refs = refs[1:1 + num_weights]
        o_ref = refs[1 + num_weights]

        inv_n = jnp.float32(1.0 / n_valid)
        need_mask = n_pad != n_valid
        if need_mask:
            row_ids = jax.lax.broadcasted_iota(jnp.int32, (n_pad, 1), 0)
            row_mask = (row_ids < n_valid).astype(jnp.float32)

        h = x_ref[...]                                  # (n_pad, F0) bf16, padded rows zero

        # Hidden layers: Linear -> BatchNorm1d (batch stats, biased var) -> ReLU
        for li in range(num_hidden):
            # MXU: bf16 x bf16 operands, f32 accumulation.
            z = jnp.dot(h, w_refs[li][...], preferred_element_type=jnp.float32)
            # BN statistics in f32 (padded rows of z are zero -> sums are exact).
            mean = jnp.sum(z, axis=0, keepdims=True) * inv_n          # E[z]
            ex2 = jnp.sum(z * z, axis=0, keepdims=True) * inv_n       # E[z^2]
            var = jnp.maximum(ex2 - mean * mean, 0.0)                 # clamp cancellation
            a = jnp.maximum((z - mean) * jax.lax.rsqrt(var + BN_EPS), 0.0)
            if need_mask and (li + 1 < num_hidden):
                # Normalization made padded rows nonzero; re-zero them so the next
                # layer's batch statistics stay uncontaminated.
                a = a * row_mask
            h = a.astype(jnp.bfloat16)                                # bf16 for next MXU op

        # Final projection (no bias, no BN/ReLU). Lane-dense (128-padded) f32 store.
        o_ref[...] = jnp.dot(h, w_refs[-1][...], preferred_element_type=jnp.float32)

    return kernel


# ---------------------------------------------------------------------------
# VMEM budget: size the scoped limit from the actual live set, per generation.
# ---------------------------------------------------------------------------
def _vmem_limit_bytes(n_pad, padded_weights, out_cols):
    feat_max = max(max(w.shape) for w in padded_weights)
    x_bytes = n_pad * padded_weights[0].shape[0] * 2                  # bf16 input
    w_bytes = sum(int(w.size) * 2 for w in padded_weights)            # bf16 weights
    out_bytes = n_pad * out_cols * 4                                  # f32 output
    act_bytes = 4 * n_pad * feat_max * 4                              # ~4 live f32 slabs
    need = x_bytes + w_bytes + out_bytes + act_bytes
    limit = int(need * 1.5) + (4 << 20)                               # headroom
    try:
        cap = int(pltpu.get_tpu_info().vmem_capacity_bytes) * 7 // 8  # 64 MiB v7x / 128 MiB v5e,v6e
    except Exception:
        cap = 56 << 20                                                # conservative (v7x-safe)
    return max(16 << 20, min(limit, cap))


# ---------------------------------------------------------------------------
# Wrapper: pad x -> single pallas_call -> slice
# ---------------------------------------------------------------------------
@jax.jit
def feat_transform_net_forward(x, *padded_weights):
    """x: (N, x_dim) f32; padded_weights: pre-padded, pre-cast bf16 (in_pad, out_pad)."""
    n, x_dim = x.shape
    n_pad = _round_up(n, SUBLANE)
    in_pad0 = padded_weights[0].shape[0]
    out_pad = padded_weights[-1].shape[1]

    # Only the activation is padded/cast per call; weights were prepared once at init.
    x_p = _pad2d(x, n_pad, in_pad0).astype(jnp.bfloat16)

    kernel = _make_fused_kernel(len(padded_weights), n, n_pad)

    out_p = pl.pallas_call(
        kernel,
        out_shape=jax.ShapeDtypeStruct((n_pad, out_pad), jnp.float32),
        in_specs=[pl.BlockSpec(memory_space=pltpu.MemorySpace.VMEM)]
        * (1 + len(padded_weights)),
        out_specs=pl.BlockSpec(memory_space=pltpu.MemorySpace.VMEM),
        compiler_params=pltpu.CompilerParams(
            vmem_limit_bytes=_vmem_limit_bytes(n_pad, padded_weights, out_pad)),
    )(x_p, *padded_weights)

    # NOTE: downstream code that can consume the padded (n_pad, 128*k) slab directly
    # should do so and skip this slice (it is an extra HBM copy for large N).
    return out_p[:n, :x_dim]


# ---------------------------------------------------------------------------
# Parameter construction / preparation.
# Weights are stored as (in_features, out_features), i.e. transposed vs PyTorch,
# so the kernel computes y = x @ W == x @ W_pt.T.
# ---------------------------------------------------------------------------
def init_feat_transform_net(key, x_dim, h_dim, num_layers):
    weights = []
    input_dim = x_dim
    for _ in range(num_layers - 1):
        key, sub = jax.random.split(key)
        bound = 1.0 / float(input_dim) ** 0.5
        weights.append(
            jax.random.uniform(sub, (input_dim, h_dim), jnp.float32, -bound, bound))
        input_dim = h_dim
    key, sub = jax.random.split(key)
    bound = 1.0 / float(input_dim) ** 0.5
    weights.append(
        jax.random.uniform(sub, (input_dim, x_dim), jnp.float32, -bound, bound))
    return weights


def prepare_feat_transform_params(weights):
    """Pad feature dims to multiples of 128 and cast to bf16 — ONCE, outside the forward."""
    padded = []
    for w in weights:
        ip = _round_up(w.shape[0], LANE)
        op = _round_up(w.shape[1], LANE)
        padded.append(_pad2d(jnp.asarray(w, jnp.float32), ip, op).astype(jnp.bfloat16))
    return tuple(padded)


# ---------------------------------------------------------------------------
# Pure-JAX references for correctness checking.
# ---------------------------------------------------------------------------
def _reference_forward_f32(x, weights):
    out = x
    for w in weights[:-1]:
        h = out @ w
        mean = jnp.mean(h, axis=0, keepdims=True)
        var = jnp.mean((h - mean) ** 2, axis=0, keepdims=True)
        out = jnp.maximum((h - mean) * jax.lax.rsqrt(var + BN_EPS), 0.0)
    return out @ weights[-1]


def _reference_forward_bf16(x, weights):
    """Mirrors the kernel numerics: bf16 MXU operands, f32 accumulation & BN math."""
    h = x.astype(jnp.bfloat16)
    for w in weights[:-1]:
        z = jnp.dot(h, w.astype(jnp.bfloat16), preferred_element_type=jnp.float32)
        mean = jnp.mean(z, axis=0, keepdims=True)
        ex2 = jnp.mean(z * z, axis=0, keepdims=True)
        var = jnp.maximum(ex2 - mean * mean, 0.0)
        h = jnp.maximum((z - mean) * jax.lax.rsqrt(var + BN_EPS), 0.0).astype(jnp.bfloat16)
    return jnp.dot(h, weights[-1].astype(jnp.bfloat16), preferred_element_type=jnp.float32)


# ---------------------------------------------------------------------------
if __name__ == "__main__":
    x_dim, h_dim, num_layers = 16, 32, 3
    batch = 8   # NOTE: fused kernel pays off at >=512-1024 rows; small here for the test.

    key = jax.random.PRNGKey(0)
    key_x, key_w = jax.random.split(key)

    x = jax.random.normal(key_x, (batch, x_dim), dtype=jnp.float32)
    weights = init_feat_transform_net(key_w, x_dim, h_dim, num_layers)

    # Pad + bf16-cast weights once (hoisted out of the per-call forward).
    params = prepare_feat_transform_params(weights)

    out = feat_transform_net_forward(x, *params)
    out = jax.block_until_ready(out)

    assert out.shape == (batch, x_dim), out.shape

    # Tight check against a reference with matched (bf16-operand) numerics.
    ref_bf16 = _reference_forward_bf16(x, weights)
    assert jnp.allclose(out, ref_bf16, atol=1e-4, rtol=1e-4), "mismatch vs bf16-matched reference"

    # Loose sanity check against the pure-f32 reference (bf16 quantization noise).
    ref_f32 = _reference_forward_f32(x, weights)
    assert jnp.allclose(out, ref_f32, atol=1e-1, rtol=1e-1), "mismatch vs f32 reference"

    print("KERNEL_OK")
</pallas_src>

<mosaic_0001>
module attributes {stable_mosaic.version = 11 : i64} {
  func.func @kernel(%arg0: memref<8x128xbf16, #tpu.memory_space<vmem>>, %arg1: memref<128x128xbf16, #tpu.memory_space<vmem>>, %arg2: memref<128x128xbf16, #tpu.memory_space<vmem>>, %arg3: memref<128x128xbf16, #tpu.memory_space<vmem>>, %arg4: memref<8x128xf32, #tpu.memory_space<vmem>>) attributes {dimension_semantics = [], scalar_prefetch = 0 : i64, scratch_operands = 0 : i64, tpu.core_type = #tpu.core_type<tc>} {
    %c0 = arith.constant 0 : index
    %c0_0 = arith.constant 0 : index
    %0 = vector.load %arg0[%c0, %c0_0] : memref<8x128xbf16, #tpu.memory_space<vmem>>, vector<8x128xbf16>
    %c0_1 = arith.constant 0 : index
    %c0_2 = arith.constant 0 : index
    %1 = vector.load %arg1[%c0_1, %c0_2] : memref<128x128xbf16, #tpu.memory_space<vmem>>, vector<128x128xbf16>
    %cst = arith.constant dense<0.000000e+00> : vector<8x128xf32>
    %2 = tpu.matmul %0, %1, %cst {dimension_numbers = #tpu.dot_dimension_numbers<[1], [0], [0], [1], [0, 0, 1, 1], [], []>} : vector<8x128xbf16>, vector<128x128xbf16>, vector<8x128xf32> -> vector<8x128xf32>
    %cst_3 = arith.constant dense<0.000000e+00> : vector<128xf32>
    %3 = vector.multi_reduction <add>, %2, %cst_3 [0] : vector<8x128xf32> to vector<128xf32>
    %4 = vector.shape_cast %3 : vector<128xf32> to vector<1x128xf32>
    %cst_4 = arith.constant 1.250000e-01 : f32
    %5 = vector.broadcast %cst_4 : f32 to vector<1x128xf32>
    %6 = arith.mulf %4, %5 : vector<1x128xf32>
    %7 = arith.mulf %2, %2 : vector<8x128xf32>
    %cst_5 = arith.constant dense<0.000000e+00> : vector<128xf32>
    %8 = vector.multi_reduction <add>, %7, %cst_5 [0] : vector<8x128xf32> to vector<128xf32>
    %9 = vector.shape_cast %8 : vector<128xf32> to vector<1x128xf32>
    %cst_6 = arith.constant 1.250000e-01 : f32
    %10 = vector.broadcast %cst_6 : f32 to vector<1x128xf32>
    %11 = arith.mulf %9, %10 : vector<1x128xf32>
    %12 = arith.mulf %6, %6 : vector<1x128xf32>
    %13 = arith.subf %11, %12 : vector<1x128xf32>
    %cst_7 = arith.constant 0.000000e+00 : f32
    %14 = vector.broadcast %cst_7 : f32 to vector<1x128xf32>
    %15 = arith.maximumf %13, %14 : vector<1x128xf32>
    %16 = vector.broadcast %6 : vector<1x128xf32> to vector<8x128xf32>
    %17 = arith.subf %2, %16 : vector<8x128xf32>
    %cst_8 = arith.constant 9.99999974E-6 : f32
    %18 = vector.broadcast %cst_8 : f32 to vector<1x128xf32>
    %19 = arith.addf %15, %18 : vector<1x128xf32>
    %20 = math.rsqrt %19 : vector<1x128xf32>
    %21 = vector.broadcast %20 : vector<1x128xf32> to vector<8x128xf32>
    %22 = arith.mulf %17, %21 : vector<8x128xf32>
    %cst_9 = arith.constant 0.000000e+00 : f32
    %23 = vector.broadcast %cst_9 : f32 to vector<8x128xf32>
    %24 = arith.maximumf %22, %23 : vector<8x128xf32>
    %25 = arith.truncf %24 : vector<8x128xf32> to vector<8x128xbf16>
    %c0_10 = arith.constant 0 : index
    %c0_11 = arith.constant 0 : index
    %26 = vector.load %arg2[%c0_10, %c0_11] : memref<128x128xbf16, #tpu.memory_space<vmem>>, vector<128x128xbf16>
    %cst_12 = arith.constant dense<0.000000e+00> : vector<8x128xf32>
    %27 = tpu.matmul %25, %26, %cst_12 {dimension_numbers = #tpu.dot_dimension_numbers<[1], [0], [0], [1], [0, 0, 1, 1], [], []>} : vector<8x128xbf16>, vector<128x128xbf16>, vector<8x128xf32> -> vector<8x128xf32>
    %cst_13 = arith.constant dense<0.000000e+00> : vector<128xf32>
    %28 = vector.multi_reduction <add>, %27, %cst_13 [0] : vector<8x128xf32> to vector<128xf32>
    %29 = vector.shape_cast %28 : vector<128xf32> to vector<1x128xf32>
    %cst_14 = arith.constant 1.250000e-01 : f32
    %30 = vector.broadcast %cst_14 : f32 to vector<1x128xf32>
    %31 = arith.mulf %29, %30 : vector<1x128xf32>
    %32 = arith.mulf %27, %27 : vector<8x128xf32>
    %cst_15 = arith.constant dense<0.000000e+00> : vector<128xf32>
    %33 = vector.multi_reduction <add>, %32, %cst_15 [0] : vector<8x128xf32> to vector<128xf32>
    %34 = vector.shape_cast %33 : vector<128xf32> to vector<1x128xf32>
    %cst_16 = arith.constant 1.250000e-01 : f32
    %35 = vector.broadcast %cst_16 : f32 to vector<1x128xf32>
    %36 = arith.mulf %34, %35 : vector<1x128xf32>
    %37 = arith.mulf %31, %31 : vector<1x128xf32>
    %38 = arith.subf %36, %37 : vector<1x128xf32>
    %cst_17 = arith.constant 0.000000e+00 : f32
    %39 = vector.broadcast %cst_17 : f32 to vector<1x128xf32>
    %40 = arith.maximumf %38, %39 : vector<1x128xf32>
    %41 = vector.broadcast %31 : vector<1x128xf32> to vector<8x128xf32>
    %42 = arith.subf %27, %41 : vector<8x128xf32>
    %cst_18 = arith.constant 9.99999974E-6 : f32
    %43 = vector.broadcast %cst_18 : f32 to vector<1x128xf32>
    %44 = arith.addf %40, %43 : vector<1x128xf32>
    %45 = math.rsqrt %44 : vector<1x128xf32>
    %46 = vector.broadcast %45 : vector<1x128xf32> to vector<8x128xf32>
    %47 = arith.mulf %42, %46 : vector<8x128xf32>
    %cst_19 = arith.constant 0.000000e+00 : f32
    %48 = vector.broadcast %cst_19 : f32 to vector<8x128xf32>
    %49 = arith.maximumf %47, %48 : vector<8x128xf32>
    %50 = arith.truncf %49 : vector<8x128xf32> to vector<8x128xbf16>
    %c0_20 = arith.constant 0 : index
    %c0_21 = arith.constant 0 : index
    %51 = vector.load %arg3[%c0_20, %c0_21] : memref<128x128xbf16, #tpu.memory_space<vmem>>, vector<128x128xbf16>
    %cst_22 = arith.constant dense<0.000000e+00> : vector<8x128xf32>
    %52 = tpu.matmul %50, %51, %cst_22 {dimension_numbers = #tpu.dot_dimension_numbers<[1], [0], [0], [1], [0, 0, 1, 1], [], []>} : vector<8x128xbf16>, vector<128x128xbf16>, vector<8x128xf32> -> vector<8x128xf32>
    %c0_23 = arith.constant 0 : index
    %c0_24 = arith.constant 0 : index
    %53 = vector.load %arg4[%c0_23, %c0_24] : memref<8x128xf32, #tpu.memory_space<vmem>>, vector<8x128xf32>
    tpu.vector_store %arg4[%c0_23, %c0_24], %52 {strides = array<i32>} : memref<8x128xf32, #tpu.memory_space<vmem>>, vector<8x128xf32>,
    return
  }
}

</mosaic_0001>

<llo_original>
// kernel: feat_transform_net_forward.1
$region0: #{feat_transform_net_forward.1}
  #allocation0 [shape = 'u32[]', space=smem, size = 0x4, offset = 0x4, fixed_abs, tag = 'smem constant byte address 0x4 - core index']
  #allocation1 [shape = 'u32[144,128]{1,0:T(1,128)}', space=vmem, size = 0x12000, scoped, tag = 'internal scratch']
  %s0 = inlined_call_operand.vmem [shape: bf16[8,128], index: 0, kind: input, shape index: {}]
  %s1 = inlined_call_operand.hbm [shape: bf16[128,128], index: 1, kind: input, shape index: {}]
  %s2 = inlined_call_operand.hbm [shape: bf16[128,128], index: 2, kind: input, shape index: {}]
  %s3 = inlined_call_operand.hbm [shape: bf16[128,128], index: 3, kind: input, shape index: {}]
  %s4 = inlined_call_operand.hbm [shape: f32[8,128], index: 4, kind: output, shape index: {}]
  %s5 = sld [smem:[#allocation0]]
  $region38: #{feat_transform_net_forward.1} parent=0
    _
  %s7 = ssub.s32 1, %s5
  %s8 = scalar_select 0, %s7, %s5
  $region1: #{feat_transform_net_forward.1} parent=0
    #allocation2 [shape = 'u8[32768]{0}', space=vmem, size = 0x8000, scoped, tag = 'input window, operand 1, single buffered']
    #allocation3 [shape = 's32[1]{0}', space=sflag, size = 0x4, scoped, tag = 'scoped memory for feat_transform_net_forward.1']
    #allocation4 [shape = 's32[1]{0}', space=sflag, size = 0x4, scoped, tag = 'scoped memory for feat_transform_net_forward.1']
    #allocation5 [shape = 'u8[32768]{0}', space=vmem, size = 0x8000, scoped, tag = 'input window, operand 2, single buffered']
    #allocation6 [shape = 's32[1]{0}', space=sflag, size = 0x4, scoped, tag = 'scoped memory for feat_transform_net_forward.1']
    #allocation7 [shape = 'u8[32768]{0}', space=vmem, size = 0x8000, scoped, tag = 'input window, operand 3, single buffered']
    #allocation8 [shape = 'u8[4096]{0}', space=vmem, size = 0x1000, scoped, tag = 'output window, operand 0, single buffered']
    %9 = vsyncpa [#allocation3], 0
    %10 = vsyncpa [#allocation6], 0
    %11 = vsyncpa [#allocation4], 0
    // Predicated region
    $region2: #{feat_transform_net_forward.1} parent=1 // pred_check
      _
    $region3: #{feat_transform_net_forward.1} parent=1 // pred_check_branch
      %13 = sbr.rel (0) target = $region5
    $region4: #{feat_transform_net_forward.1} parent=1 // pred_region
      _
    $region5: #{feat_transform_net_forward.1} parent=1 // pred_fallthru
      _
    // Predicated region
    $region6: #{feat_transform_net_forward.1} parent=1 // pred_check
      _
    $region7: #{feat_transform_net_forward.1} parent=1 // pred_check_branch
      %15 = sbr.rel (0) target = $region9
    $region8: #{feat_transform_net_forward.1} parent=1 // pred_region
      %s17 = ssub.s32 1024, 1024
      %18 = vsyncadd [#allocation3], %s17
      %s19 = sshll.u32 [#allocation2], 4
      %s20 = int_to_ptr.vmem [resolvable:$true] %s19
      %25 = dma.hbm_to_vmem [thread:$0]  %s1, 1024, %s20, [#allocation3], 64, 64, 4
    $region9: #{feat_transform_net_forward.1} parent=1 // pred_fallthru
      _
    // Predicated region
    $region10: #{feat_transform_net_forward.1} parent=1 // pred_check
      _
    $region11: #{feat_transform_net_forward.1} parent=1 // pred_check_branch
      %27 = sbr.rel (0) target = $region13
    $region12: #{feat_transform_net_forward.1} parent=1 // pred_region
      %s29 = ssub.s32 1024, 1024
      %30 = vsyncadd [#allocation6], %s29
      %s31 = sshll.u32 [#allocation5], 4
      %s32 = int_to_ptr.vmem [resolvable:$true] %s31
      %37 = dma.hbm_to_vmem [thread:$0]  %s2, 1024, %s32, [#allocation6], 64, 64, 4
    $region13: #{feat_transform_net_forward.1} parent=1 // pred_fallthru
      _
    // Predicated region
    $region14: #{feat_transform_net_forward.1} parent=1 // pred_check
      _
    $region15: #{feat_transform_net_forward.1} parent=1 // pred_check_branch
      %39 = sbr.rel (0) target = $region17
    $region16: #{feat_transform_net_forward.1} parent=1 // pred_region
      %s41 = ssub.s32 1024, 1024
      %42 = vsyncadd [#allocation6], %s41
      %s43 = sshll.u32 [#allocation7], 4
      %s44 = int_to_ptr.vmem [resolvable:$true] %s43
      %49 = dma.hbm_to_vmem [thread:$0]  %s3, 1024, %s44, [#allocation6], 64, 64, 4
    $region17: #{feat_transform_net_forward.1} parent=1 // pred_fallthru
      _
    // Predicated region
    $region18: #{feat_transform_net_forward.1} parent=1 // pred_check
      _
    $region19: #{feat_transform_net_forward.1} parent=1 // pred_check_branch
      %51 = sbr.rel (0) target = $region21
    $region20: #{feat_transform_net_forward.1} parent=1 // pred_region
      %52 = dma.done [#allocation3], 1024
    $region21: #{feat_transform_net_forward.1} parent=1 // pred_fallthru
      _
    // Predicated region
    $region22: #{feat_transform_net_forward.1} parent=1 // pred_check
      _
    $region23: #{feat_transform_net_forward.1} parent=1 // pred_check_branch
      %54 = sbr.rel (0) target = $region25
    $region24: #{feat_transform_net_forward.1} parent=1 // pred_region
      %55 = dma.done [#allocation6], 1024
    $region25: #{feat_transform_net_forward.1} parent=1 // pred_fallthru
      _
    // Predicated region
    $region26: #{feat_transform_net_forward.1} parent=1 // pred_check
      _
    $region27: #{feat_transform_net_forward.1} parent=1 // pred_check_branch
      %57 = sbr.rel (0) target = $region29
    $region28: #{feat_transform_net_forward.1} parent=1 // pred_region
      %58 = dma.done [#allocation6], 1024
    $region29: #{feat_transform_net_forward.1} parent=1 // pred_fallthru
      _
    %v60 = vld [vmem:[%s0] sm:$0xf]
    %v61 = vld [vmem:[#allocation2] sm:$0xf]
    %v62 = vld [vmem:[#allocation2 + $0x4] sm:$0xf]
    %v63 = vld [vmem:[#allocation2 + $0x8] sm:$0xf]
    %v64 = vld [vmem:[#allocation2 + $0xc] sm:$0xf]
    %v65 = vld [vmem:[#allocation2 + $0x10] sm:$0xf]
    %v66 = vld [vmem:[#allocation2 + $0x14] sm:$0xf]
    %v67 = vld [vmem:[#allocation2 + $0x18] sm:$0xf]
    %v68 = vld [vmem:[#allocation2 + $0x1c] sm:$0xf]
    %v69 = vld [vmem:[#allocation2 + $0x20] sm:$0xf]
    %v70 = vld [vmem:[#allocation2 + $0x24] sm:$0xf]
    %v71 = vld [vmem:[#allocation2 + $0x28] sm:$0xf]
    %v72 = vld [vmem:[#allocation2 + $0x2c] sm:$0xf]
    %v73 = vld [vmem:[#allocation2 + $0x30] sm:$0xf]
    %v74 = vld [vmem:[#allocation2 + $0x34] sm:$0xf]
    %v75 = vld [vmem:[#allocation2 + $0x38] sm:$0xf]
    %v76 = vld [vmem:[#allocation2 + $0x3c] sm:$0xf]
    %v93 = vunpack.c.l.b16 %v61
    %v94 = vunpack.c.l.b16 %v62
    %v95 = vunpack.c.l.b16 %v63
    %v96 = vunpack.c.l.b16 %v64
    %v97 = vunpack.c.l.b16 %v65
    %v98 = vunpack.c.l.b16 %v66
    %v99 = vunpack.c.l.b16 %v67
    %v100 = vunpack.c.l.b16 %v68
    %v101 = vunpack.c.l.b16 %v69
    %v102 = vunpack.c.l.b16 %v70
    %v103 = vunpack.c.l.b16 %v71
    %v104 = vunpack.c.l.b16 %v72
    %v105 = vunpack.c.l.b16 %v73
    %v106 = vunpack.c.l.b16 %v74
    %v107 = vunpack.c.l.b16 %v75
    %v108 = vunpack.c.l.b16 %v76
    %v109 = vpack.c.b16 %v94, %v93
    %v110 = vpack.c.b16 %v96, %v95
    %v111 = vpack.c.b16 %v98, %v97
    %v112 = vpack.c.b16 %v100, %v99
    %v113 = vpack.c.b16 %v102, %v101
    %v114 = vpack.c.b16 %v104, %v103
    %v115 = vpack.c.b16 %v106, %v105
    %v116 = vpack.c.b16 %v108, %v107
    %125 = vmatprep.subr.bf16.mxu0 0
    %126 = vmatpush1.bf16.msra.mxu0 %v109
    %127 = vmatprep.subr.bf16.mxu0 0
    %128 = vmatpush1.bf16.msra.mxu0 %v110
    %129 = vmatprep.subr.bf16.mxu0 0
    %130 = vmatpush1.bf16.msra.mxu0 %v111
    %131 = vmatprep.subr.bf16.mxu0 0
    %132 = vmatpush1.bf16.msra.mxu0 %v112
    %133 = vmatprep.subr.bf16.mxu0 0
    %134 = vmatpush1.bf16.msra.mxu0 %v113
    %135 = vmatprep.subr.bf16.mxu0 0
    %136 = vmatpush1.bf16.msra.mxu0 %v114
    %137 = vmatprep.subr.bf16.mxu0 0
    %138 = vmatpush1.bf16.msra.mxu0 %v115
    %139 = vmatprep.subr.bf16.mxu0 0
    %140 = vmatpush1.bf16.msra.mxu0 %v116
    %141 = vmatprep.subr.bf16.mxu0 0
    %142 = vmatpush1.bf16.msra.mxu0 0
    %143 = vmatprep.subr.bf16.mxu0 0
    %144 = vmatpush1.bf16.msra.mxu0 0
    %145 = vmatprep.subr.bf16.mxu0 0
    %146 = vmatpush1.bf16.msra.mxu0 0
    %147 = vmatprep.subr.bf16.mxu0 0
    %148 = vmatpush1.bf16.msra.mxu0 0
    %149 = vmatprep.subr.bf16.mxu0 0
    %150 = vmatpush1.bf16.msra.mxu0 0
    %151 = vmatprep.subr.bf16.mxu0 0
    %152 = vmatpush1.bf16.msra.mxu0 0
    %153 = vmatprep.subr.bf16.mxu0 0
    %154 = vmatpush1.bf16.msra.mxu0 0
    %155 = vmatprep.subr.bf16.mxu0 0
    %156 = vmatpush1.bf16.msra.mxu0 0
    %157 = vmatprep.mubr.bf16.mxu0 0
    %158 = vmatmul.mubr.bf16.gmra.mrb[0].mxu0 %v60
    %v159 = vpop.f32.mrb[0].mxu0
    %v160 = vadd.f32 0.0, %v159
    %v161 = vpop.f32.mrb[0].mxu0
    %v162 = vpop.f32.mrb[0].mxu0
    %v163 = vpop.f32.mrb[0].mxu0
    %164 = vdwg.mxu0
    %v165 = vrot.slane %v160, 4
    %v166 = vadd.f32 %v160, %v165
    %v167 = vrot.slane %v166, 2
    %v168 = vadd.f32 %v166, %v167
    %v169 = vrot.slane %v168, 1
    %v170 = vadd.f32 %v168, %v169
    %v171 = vmul.f32 %v170, 0.125
    %v172 = vmul.f32 %v160, %v160
    %v173 = vrot.slane %v172, 4
    %v174 = vadd.f32 %v172, %v173
    %v175 = vrot.slane %v174, 2
    %v176 = vadd.f32 %v174, %v175
    %v177 = vrot.slane %v176, 1
    %v178 = vadd.f32 %v176, %v177
    %v179 = vmul.f32 %v178, 0.125
    %v180 = vmul.f32 %v171, %v171
    %v181 = vsub.f32 %v179, %v180
    %v182 = vmax.f32 %v181, 0.0
    %v183 = vsub.f32 %v160, %v171
    %v184 = vadd.f32 %v182, 1e-05
    %v185 = vrsqrt.pop %v184
    %v186 = vmul.f32 %v183, %v185
    %v187 = vmax.f32 %v186, 0.0
    %v188 = vpack.c.bf16 %v187, %v187
    %v189 = vld [vmem:[#allocation5] sm:$0xf]
    %v190 = vld [vmem:[#allocation5 + $0x4] sm:$0xf]
    %v191 = vld [vmem:[#allocation5 + $0x8] sm:$0xf]
    %v192 = vld [vmem:[#allocation5 + $0xc] sm:$0xf]
    %v193 = vld [vmem:[#allocation5 + $0x10] sm:$0xf]
    %v194 = vld [vmem:[#allocation5 + $0x14] sm:$0xf]
    %v195 = vld [vmem:[#allocation5 + $0x18] sm:$0xf]
    %v196 = vld [vmem:[#allocation5 + $0x1c] sm:$0xf]
    %v197 = vld [vmem:[#allocation5 + $0x20] sm:$0xf]
    %v198 = vld [vmem:[#allocation5 + $0x24] sm:$0xf]
    %v199 = vld [vmem:[#allocation5 + $0x28] sm:$0xf]
    %v200 = vld [vmem:[#allocation5 + $0x2c] sm:$0xf]
    %v201 = vld [vmem:[#allocation5 + $0x30] sm:$0xf]
    %v202 = vld [vmem:[#allocation5 + $0x34] sm:$0xf]
    %v203 = vld [vmem:[#allocation5 + $0x38] sm:$0xf]
    %v204 = vld [vmem:[#allocation5 + $0x3c] sm:$0xf]
    %v221 = vunpack.c.l.b16 %v189
    %v222 = vunpack.c.l.b16 %v190
    %v223 = vunpack.c.l.b16 %v191
    %v224 = vunpack.c.l.b16 %v192
    %v225 = vunpack.c.l.b16 %v193
    %v226 = vunpack.c.l.b16 %v194
    %v227 = vunpack.c.l.b16 %v195
    %v228 = vunpack.c.l.b16 %v196
    %v229 = vunpack.c.l.b16 %v197
    %v230 = vunpack.c.l.b16 %v198
    %v231 = vunpack.c.l.b16 %v199
    %v232 = vunpack.c.l.b16 %v200
    %v233 = vunpack.c.l.b16 %v201
    %v234 = vunpack.c.l.b16 %v202
    %v235 = vunpack.c.l.b16 %v203
    %v236 = vunpack.c.l.b16 %v204
    %v237 = vpack.c.b16 %v222, %v221
    %v238 = vpack.c.b16 %v224, %v223
    %v239 = vpack.c.b16 %v226, %v225
    %v240 = vpack.c.b16 %v228, %v227
    %v241 = vpack.c.b16 %v230, %v229
    %v242 = vpack.c.b16 %v232, %v231
    %v243 = vpack.c.b16 %v234, %v233
    %v244 = vpack.c.b16 %v236, %v235
    %253 = vmatprep.subr.bf16.mxu0 0
    %254 = vmatpush1.bf16.msra.mxu0 %v237
    %255 = vmatprep.subr.bf16.mxu0 0
    %256 = vmatpush1.bf16.msra.mxu0 %v238
    %257 = vmatprep.subr.bf16.mxu0 0
    %258 = vmatpush1.bf16.msra.mxu0 %v239
    %259 = vmatprep.subr.bf16.mxu0 0
    %260 = vmatpush1.bf16.msra.mxu0 %v240
    %261 = vmatprep.subr.bf16.mxu0 0
    %262 = vmatpush1.bf16.msra.mxu0 %v241
    %263 = vmatprep.subr.bf16.mxu0 0
    %264 = vmatpush1.bf16.msra.mxu0 %v242
    %265 = vmatprep.subr.bf16.mxu0 0
    %266 = vmatpush1.bf16.msra.mxu0 %v243
    %267 = vmatprep.subr.bf16.mxu0 0
    %268 = vmatpush1.bf16.msra.mxu0 %v244
    %269 = vmatprep.subr.bf16.mxu0 0
    %270 = vmatpush1.bf16.msra.mxu0 0
    %271 = vmatprep.subr.bf16.mxu0 0
    %272 = vmatpush1.bf16.msra.mxu0 0
    %273 = vmatprep.subr.bf16.mxu0 0
    %274 = vmatpush1.bf16.msra.mxu0 0
    %275 = vmatprep.subr.bf16.mxu0 0
    %276 = vmatpush1.bf16.msra.mxu0 0
    %277 = vmatprep.subr.bf16.mxu0 0
    %278 = vmatpush1.bf16.msra.mxu0 0
    %279 = vmatprep.subr.bf16.mxu0 0
    %280 = vmatpush1.bf16.msra.mxu0 0
    %281 = vmatprep.subr.bf16.mxu0 0
    %282 = vmatpush1.bf16.msra.mxu0 0
    %283 = vmatprep.subr.bf16.mxu0 0
    %284 = vmatpush1.bf16.msra.mxu0 0
    %285 = vmatprep.mubr.bf16.mxu0 0
    %286 = vmatmul.mubr.bf16.gmra.mrb[0].mxu0 %v188
    %v287 = vpop.f32.mrb[0].mxu0
    %v288 = vadd.f32 0.0, %v287
    %v289 = vpop.f32.mrb[0].mxu0
    %v290 = vpop.f32.mrb[0].mxu0
    %v291 = vpop.f32.mrb[0].mxu0
    %292 = vdwg.mxu0
    %v293 = vrot.slane %v288, 4
    %v294 = vadd.f32 %v288, %v293
    %v295 = vrot.slane %v294, 2
    %v296 = vadd.f32 %v294, %v295
    %v297 = vrot.slane %v296, 1
    %v298 = vadd.f32 %v296, %v297
    %v299 = vmul.f32 %v298, 0.125
    %v300 = vmul.f32 %v288, %v288
    %v301 = vrot.slane %v300, 4
    %v302 = vadd.f32 %v300, %v301
    %v303 = vrot.slane %v302, 2
    %v304 = vadd.f32 %v302, %v303
    %v305 = vrot.slane %v304, 1
    %v306 = vadd.f32 %v304, %v305
    %v307 = vmul.f32 %v306, 0.125
    %v308 = vmul.f32 %v299, %v299
    %v309 = vsub.f32 %v307, %v308
    %v310 = vmax.f32 %v309, 0.0
    %v311 = vsub.f32 %v288, %v299
    %v312 = vadd.f32 %v310, 1e-05
    %v313 = vrsqrt.pop %v312
    %v314 = vmul.f32 %v311, %v313
    %v315 = vmax.f32 %v314, 0.0
    %v316 = vpack.c.bf16 %v315, %v315
    %v317 = vld [vmem:[#allocation7] sm:$0xf]
    %v318 = vld [vmem:[#allocation7 + $0x4] sm:$0xf]
    %v319 = vld [vmem:[#allocation7 + $0x8] sm:$0xf]
    %v320 = vld [vmem:[#allocation7 + $0xc] sm:$0xf]
    %v321 = vld [vmem:[#allocation7 + $0x10] sm:$0xf]
    %v322 = vld [vmem:[#allocation7 + $0x14] sm:$0xf]
    %v323 = vld [vmem:[#allocation7 + $0x18] sm:$0xf]
    %v324 = vld [vmem:[#allocation7 + $0x1c] sm:$0xf]
    %v325 = vld [vmem:[#allocation7 + $0x20] sm:$0xf]
    %v326 = vld [vmem:[#allocation7 + $0x24] sm:$0xf]
    %v327 = vld [vmem:[#allocation7 + $0x28] sm:$0xf]
    %v328 = vld [vmem:[#allocation7 + $0x2c] sm:$0xf]
    %v329 = vld [vmem:[#allocation7 + $0x30] sm:$0xf]
    %v330 = vld [vmem:[#allocation7 + $0x34] sm:$0xf]
    %v331 = vld [vmem:[#allocation7 + $0x38] sm:$0xf]
    %v332 = vld [vmem:[#allocation7 + $0x3c] sm:$0xf]
    %v349 = vunpack.c.l.b16 %v317
    %v350 = vunpack.c.l.b16 %v318
    %v351 = vunpack.c.l.b16 %v319
    %v352 = vunpack.c.l.b16 %v320
    %v353 = vunpack.c.l.b16 %v321
    %v354 = vunpack.c.l.b16 %v322
    %v355 = vunpack.c.l.b16 %v323
    %v356 = vunpack.c.l.b16 %v324
    %v357 = vunpack.c.l.b16 %v325
    %v358 = vunpack.c.l.b16 %v326
    %v359 = vunpack.c.l.b16 %v327
    %v360 = vunpack.c.l.b16 %v328
    %v361 = vunpack.c.l.b16 %v329
    %v362 = vunpack.c.l.b16 %v330
    %v363 = vunpack.c.l.b16 %v331
    %v364 = vunpack.c.l.b16 %v332
    %v365 = vpack.c.b16 %v350, %v349
    %v366 = vpack.c.b16 %v352, %v351
    %v367 = vpack.c.b16 %v354, %v353
    %v368 = vpack.c.b16 %v356, %v355
    %v369 = vpack.c.b16 %v358, %v357
    %v370 = vpack.c.b16 %v360, %v359
    %v371 = vpack.c.b16 %v362, %v361
    %v372 = vpack.c.b16 %v364, %v363
    %381 = vmatprep.subr.bf16.mxu0 0
    %382 = vmatpush1.bf16.msra.mxu0 %v365
    %383 = vmatprep.subr.bf16.mxu0 0
    %384 = vmatpush1.bf16.msra.mxu0 %v366
    %385 = vmatprep.subr.bf16.mxu0 0
    %386 = vmatpush1.bf16.msra.mxu0 %v367
    %387 = vmatprep.subr.bf16.mxu0 0
    %388 = vmatpush1.bf16.msra.mxu0 %v368
    %389 = vmatprep.subr.bf16.mxu0 0
    %390 = vmatpush1.bf16.msra.mxu0 %v369
    %391 = vmatprep.subr.bf16.mxu0 0
    %392 = vmatpush1.bf16.msra.mxu0 %v370
    %393 = vmatprep.subr.bf16.mxu0 0
    %394 = vmatpush1.bf16.msra.mxu0 %v371
    %395 = vmatprep.subr.bf16.mxu0 0
    %396 = vmatpush1.bf16.msra.mxu0 %v372
    %397 = vmatprep.subr.bf16.mxu0 0
    %398 = vmatpush1.bf16.msra.mxu0 0
    %399 = vmatprep.subr.bf16.mxu0 0
    %400 = vmatpush1.bf16.msra.mxu0 0
    %401 = vmatprep.subr.bf16.mxu0 0
    %402 = vmatpush1.bf16.msra.mxu0 0
    %403 = vmatprep.subr.bf16.mxu0 0
    %404 = vmatpush1.bf16.msra.mxu0 0
    %405 = vmatprep.subr.bf16.mxu0 0
    %406 = vmatpush1.bf16.msra.mxu0 0
    %407 = vmatprep.subr.bf16.mxu0 0
    %408 = vmatpush1.bf16.msra.mxu0 0
    %409 = vmatprep.subr.bf16.mxu0 0
    %410 = vmatpush1.bf16.msra.mxu0 0
    %411 = vmatprep.subr.bf16.mxu0 0
    %412 = vmatpush1.bf16.msra.mxu0 0
    %413 = vmatprep.mubr.bf16.mxu0 0
    %414 = vmatmul.mubr.bf16.gmra.mrb[0].mxu0 %v316
    %v415 = vpop.f32.mrb[0].mxu0
    %v416 = vadd.f32 0.0, %v415
    %v417 = vpop.f32.mrb[0].mxu0
    %v418 = vpop.f32.mrb[0].mxu0
    %v419 = vpop.f32.mrb[0].mxu0
    %420 = vdwg.mxu0
    %421 = vst [vmem:[#allocation8] sm:$0xff] %v416
    // Predicated region
    $region30: #{feat_transform_net_forward.1} parent=1 // pred_check
      _
    $region31: #{feat_transform_net_forward.1} parent=1 // pred_check_branch
      %423 = sbr.rel (0) target = $region33
    $region32: #{feat_transform_net_forward.1} parent=1 // pred_region
      %s425 = ssub.s32 128, 128
      %426 = vsyncadd [#allocation4], %s425
      %s428 = sshll.u32 [#allocation8], 4
      %s429 = int_to_ptr.vmem [resolvable:$true] %s428
      %431 = dma.vmem_to_hbm [thread:$0]  %s429, 128, %s4, [#allocation4]
    $region33: #{feat_transform_net_forward.1} parent=1 // pred_fallthru
      _
    // Predicated region
    $region34: #{feat_transform_net_forward.1} parent=1 // pred_check
      _
    $region35: #{feat_transform_net_forward.1} parent=1 // pred_check_branch
      %433 = sbr.rel (0) target = $region37
    $region36: #{feat_transform_net_forward.1} parent=1 // pred_region
      %434 = dma.done [#allocation4], 128
    $region37: #{feat_transform_net_forward.1} parent=1 // pred_fallthru
      _
    %435 = vsyncpa [#allocation3], 1
    %436 = vsyncpa [#allocation6], 1
    %437 = vsyncpa [#allocation4], 1

</llo_original>
